<compile_context>
chip_gen: v6e
topology: v6e:2x2x1
jax: 0.10.0
libtpu: 0.0.40
codegen_flags: <defaults>
</compile_context>

<pallas_src>
import functools

import jax
import jax.numpy as jnp
from jax import lax
from jax.experimental import pallas as pl
from jax.experimental.pallas import tpu as pltpu

LANE = 128          # TPU lane width
SUBLANE = 8         # f32 sublanes per vreg
BLOCK_ROWS = 4096   # rows per grid step: 4096*128*4B = 2 MiB / input / buffer
NUM_SHARDS = 2      # leading "parallel" axis (v7x megacore; neutral elsewhere)


def _accumulate(out_ref, vals, block_rows):
    """Adds a (block_rows, LANE) tile of per-element losses into the (1,8,128) out."""
    if block_rows % SUBLANE == 0:
        # Leading-axis reduction = pure VPU vreg adds, no cross-lane traffic.
        part = vals.reshape(block_rows // SUBLANE, SUBLANE, LANE).sum(axis=0)
    else:
        # Tiny single-block fallback (rows < one sublane group): reduce to one
        # lane-row and place it in sublane 0 so the wrapper's final sum is exact.
        lane_sum = jnp.sum(vals, axis=0, keepdims=True)                  # (1, LANE)
        sub_id = lax.broadcasted_iota(jnp.int32, (SUBLANE, LANE), 0)
        part = jnp.where(sub_id == 0,
                         jnp.broadcast_to(lane_sum, (SUBLANE, LANE)),
                         jnp.float32(0.0))
    out_ref[...] += part.reshape(1, SUBLANE, LANE)


def _bpr_kernel(pos_ref, neg_ref, out_ref, *, block_rows, blocks_per_shard, batch):
    """Accumulates sum of -log(sigmoid(pos-neg)) for one (block_rows, 128) chunk."""
    j = pl.program_id(0)            # shard ("parallel")
    k = pl.program_id(1)            # reduction step ("arbitrary")

    @pl.when(k == 0)
    def _init():
        out_ref[...] = jnp.zeros_like(out_ref)

    pos = pos_ref[...].astype(jnp.float32)
    neg = neg_ref[...].astype(jnp.float32)
    # -log(sigmoid(pos-neg)) == softplus(neg-pos), numerically stable form.
    x = neg - pos
    nll = jnp.maximum(x, 0.0) + jnp.log(1.0 + jnp.exp(-jnp.abs(x)))

    block_elems = block_rows * LANE
    g = j * blocks_per_shard + k            # logical row-block index
    start = g * block_elems                 # first flat element of this block

    # Fast path: block lies entirely within the valid batch -> no masking.
    @pl.when(start + block_elems <= batch)
    def _full():
        _accumulate(out_ref, nll, block_rows)

    # Slow path (at most the trailing block per shard): mask out-of-range lanes
    # (host zero-pad, Pallas edge-block padding, duplicated clamped blocks).
    @pl.when(start + block_elems > batch)
    def _partial():
        idx = start + (lax.broadcasted_iota(jnp.int32, (block_rows, LANE), 0) * LANE
                       + lax.broadcasted_iota(jnp.int32, (block_rows, LANE), 1))
        _accumulate(out_ref, jnp.where(idx < batch, nll, 0.0), block_rows)


def bpr_loss(pos_scores: jax.Array, neg_scores: jax.Array,
             *, max_block_rows: int = BLOCK_ROWS) -> jax.Array:
    """Computes BPR loss for 1-D score vectors of shape [batch]."""
    assert pos_scores.shape == neg_scores.shape
    assert pos_scores.ndim == 1
    batch = pos_scores.shape[0]

    rows = pl.cdiv(batch, LANE)
    padded = rows * LANE
    if padded != batch:
        # TODO(synk): avoid this small host-side copy for ragged batches by
        # passing the flat arrays via memory_space=pl.ANY and DMA-ing manually.
        pos2d = jnp.pad(pos_scores, (0, padded - batch)).reshape(rows, LANE)
        neg2d = jnp.pad(neg_scores, (0, padded - batch)).reshape(rows, LANE)
    else:
        pos2d = pos_scores.reshape(rows, LANE)   # contiguous reshape: no copy
        neg2d = neg_scores.reshape(rows, LANE)

    # Sublane granularity for the input dtype (bf16 tiles are 16 rows, int8 32).
    itemsize = jnp.dtype(pos2d.dtype).itemsize
    sub_gran = {4: 8, 2: 16, 1: 32}.get(itemsize, 8)

    if rows >= sub_gran:
        block_rows = min(max_block_rows, (rows // sub_gran) * sub_gran)
    else:
        block_rows = rows                        # full extent (tiny batch)
    num_blocks = pl.cdiv(rows, block_rows)
    num_shards = NUM_SHARDS if num_blocks >= 2 else 1
    blocks_per_shard = pl.cdiv(num_blocks, num_shards)

    def in_index_map(j, k):
        g = j * blocks_per_shard + k
        # Clamp the (at most one) overhanging logical block of the last shard to
        # a valid block; its contribution is fully masked out in-kernel.
        return (jnp.minimum(g, num_blocks - 1), 0)

    kernel = functools.partial(_bpr_kernel, block_rows=block_rows,
                               blocks_per_shard=blocks_per_shard, batch=batch)

    n = rows * LANE
    cost = pl.CostEstimate(
        flops=8 * n,
        transcendentals=2 * n,
        bytes_accessed=2 * n * itemsize + num_shards * SUBLANE * LANE * 4)

    partials = pl.pallas_call(
        kernel,
        out_shape=jax.ShapeDtypeStruct((num_shards, SUBLANE, LANE), jnp.float32),
        grid=(num_shards, blocks_per_shard),
        in_specs=[
            pl.BlockSpec((block_rows, LANE), in_index_map),
            pl.BlockSpec((block_rows, LANE), in_index_map),
        ],
        out_specs=pl.BlockSpec((1, SUBLANE, LANE), lambda j, k: (j, 0, 0)),
        compiler_params=pltpu.CompilerParams(
            dimension_semantics=("parallel", "arbitrary"),
            vmem_limit_bytes=32 * 1024 * 1024),
        cost_estimate=cost,
    )(pos2d, neg2d)

    # Final tiny cross-lane reduce + mean in the wrapper.
    return jnp.sum(partials) * jnp.float32(1.0 / batch)


def bpr_loss_ref(pos_scores, neg_scores):
    diff = pos_scores.astype(jnp.float32) - neg_scores.astype(jnp.float32)
    return -jnp.mean(jax.nn.log_sigmoid(diff))


if __name__ == "__main__":
    key = jax.random.PRNGKey(0)

    # 1) Small batch consistent with the module: batch of (pos, neg) score pairs.
    k1, k2 = jax.random.split(key)
    batch = 8
    pos_scores = jax.random.normal(k1, (batch,), jnp.float32)
    neg_scores = jax.random.normal(k2, (batch,), jnp.float32)
    loss = bpr_loss(pos_scores, neg_scores)
    jax.block_until_ready(loss)
    ref = bpr_loss_ref(pos_scores, neg_scores)
    assert jnp.allclose(loss, ref, atol=1e-5, rtol=1e-5), (loss, ref)

    # 2) Ragged batch spanning an odd number of blocks with a small block
    #    override: exercises the 2-shard grid, the clamped overhanging block,
    #    the in-kernel tail mask and Pallas edge-block padding.
    k3, k4 = jax.random.split(jax.random.PRNGKey(1))
    batch2 = 37 * LANE + 41                 # rows=38 -> 3 blocks of 16 rows
    pos2 = jax.random.normal(k3, (batch2,), jnp.float32)
    neg2 = jax.random.normal(k4, (batch2,), jnp.float32)
    loss2 = bpr_loss(pos2, neg2, max_block_rows=16)
    jax.block_until_ready(loss2)
    ref2 = bpr_loss_ref(pos2, neg2)
    assert jnp.allclose(loss2, ref2, atol=1e-4, rtol=1e-4), (loss2, ref2)

    # 3) Default large-block path: ragged batch spanning two 4096-row blocks
    #    split across the two shards.
    k5, k6 = jax.random.split(jax.random.PRNGKey(2))
    batch3 = BLOCK_ROWS * LANE + 1000
    pos3 = jax.random.normal(k5, (batch3,), jnp.float32)
    neg3 = jax.random.normal(k6, (batch3,), jnp.float32)
    loss3 = bpr_loss(pos3, neg3)
    jax.block_until_ready(loss3)
    ref3 = bpr_loss_ref(pos3, neg3)
    assert jnp.allclose(loss3, ref3, atol=1e-4, rtol=1e-4), (loss3, ref3)

    print("KERNEL_OK")
</pallas_src>

<mosaic_0001>
module attributes {stable_mosaic.version = 11 : i64} {
  func.func @_bpr_kernel(%arg0: i32, %arg1: i32, %arg2: memref<1x128xf32, #tpu.memory_space<vmem>>, %arg3: memref<1x128xf32, #tpu.memory_space<vmem>>, %arg4: memref<1x8x128xf32, #tpu.memory_space<vmem>>) attributes {dimension_semantics = [#tpu.dimension_semantics<parallel>, #tpu.dimension_semantics<arbitrary>], iteration_bounds = array<i64: 1, 1>, scalar_prefetch = 0 : i64, scratch_operands = 0 : i64, tpu.core_type = #tpu.core_type<tc>, window_params = [{transform_indices = @transform_0, window_bounds = array<i64: 1, 128>}, {transform_indices = @transform_1, window_bounds = array<i64: 1, 128>}, {transform_indices = @transform_2, window_bounds = array<i64: 1, 8, 128>}]} {
    %c0_i32 = arith.constant 0 : i32
    %0 = arith.cmpi eq, %arg1, %c0_i32 : i32
    %1 = arith.extui %0 : i1 to i32
    %c0_i32_0 = arith.constant 0 : i32
    %2 = arith.cmpi ne, %1, %c0_i32_0 : i32
    scf.if %2 {
      %cst_11 = arith.constant 0.000000e+00 : f32
      %27 = vector.broadcast %cst_11 : f32 to vector<1x8x128xf32>
      %c0_12 = arith.constant 0 : index
      %c0_13 = arith.constant 0 : index
      %c0_14 = arith.constant 0 : index
      %28 = vector.load %arg4[%c0_12, %c0_13, %c0_14] : memref<1x8x128xf32, #tpu.memory_space<vmem>>, vector<1x8x128xf32>
      tpu.vector_store %arg4[%c0_12, %c0_13, %c0_14], %27 {strides = array<i32>} : memref<1x8x128xf32, #tpu.memory_space<vmem>>, vector<1x8x128xf32>,
    } else {
    }
    %c0 = arith.constant 0 : index
    %c0_1 = arith.constant 0 : index
    %3 = vector.load %arg2[%c0, %c0_1] : memref<1x128xf32, #tpu.memory_space<vmem>>, vector<1x128xf32>
    %c0_2 = arith.constant 0 : index
    %c0_3 = arith.constant 0 : index
    %4 = vector.load %arg3[%c0_2, %c0_3] : memref<1x128xf32, #tpu.memory_space<vmem>>, vector<1x128xf32>
    %5 = arith.subf %4, %3 : vector<1x128xf32>
    %cst = arith.constant 0.000000e+00 : f32
    %6 = vector.broadcast %cst : f32 to vector<1x128xf32>
    %7 = arith.maximumf %5, %6 : vector<1x128xf32>
    %8 = math.absf %5 : vector<1x128xf32>
    %cst_4 = arith.constant 0.000000e+00 : f32
    %9 = vector.broadcast %cst_4 : f32 to vector<1x128xf32>
    %10 = arith.subf %9, %8 : vector<1x128xf32>
    %11 = math.exp %10 : vector<1x128xf32>
    %cst_5 = arith.constant 1.000000e+00 : f32
    %12 = vector.broadcast %cst_5 : f32 to vector<1x128xf32>
    %13 = arith.addf %12, %11 : vector<1x128xf32>
    %14 = math.log %13 : vector<1x128xf32>
    %15 = arith.addf %7, %14 : vector<1x128xf32>
    %c1_i32 = arith.constant 1 : i32
    %16 = arith.muli %arg0, %c1_i32 : i32
    %17 = arith.addi %16, %arg1 : i32
    %c128_i32 = arith.constant 128 : i32
    %18 = arith.muli %17, %c128_i32 : i32
    %c128_i32_6 = arith.constant 128 : i32
    %19 = arith.addi %18, %c128_i32_6 : i32
    %c8_i32 = arith.constant 8 : i32
    %20 = arith.cmpi sle, %19, %c8_i32 : i32
    %21 = arith.extui %20 : i1 to i32
    %c0_i32_7 = arith.constant 0 : i32
    %22 = arith.cmpi ne, %21, %c0_i32_7 : i32
    scf.if %22 {
      %cst_11 = arith.constant dense<0.000000e+00> : vector<128xf32>
      %27 = vector.multi_reduction <add>, %15, %cst_11 [0] : vector<1x128xf32> to vector<128xf32>
      %28 = vector.shape_cast %27 : vector<128xf32> to vector<1x128xf32>
      %29 = tpu.iota {dimensions = array<i32: 0>} : vector<8x128xi32>
      %c0_i32_12 = arith.constant 0 : i32
      %30 = vector.broadcast %c0_i32_12 : i32 to vector<8x128xi32>
      %31 = arith.cmpi eq, %29, %30 : vector<8x128xi32>
      %32 = vector.shape_cast %28 : vector<1x128xf32> to vector<1x128xf32>
      %33 = vector.broadcast %32 : vector<1x128xf32> to vector<8x128xf32>
      %cst_13 = arith.constant 0.000000e+00 : f32
      %34 = vector.broadcast %cst_13 : f32 to vector<8x128xf32>
      %35 = arith.select %31, %33, %34 : vector<8x128xi1>, vector<8x128xf32>
      %c0_14 = arith.constant 0 : index
      %c0_15 = arith.constant 0 : index
      %c0_16 = arith.constant 0 : index
      %36 = vector.load %arg4[%c0_14, %c0_15, %c0_16] : memref<1x8x128xf32, #tpu.memory_space<vmem>>, vector<1x8x128xf32>
      %37 = vector.shape_cast %35 : vector<8x128xf32> to vector<1x8x128xf32>
      %38 = arith.addf %36, %37 : vector<1x8x128xf32>
      %c0_17 = arith.constant 0 : index
      %c0_18 = arith.constant 0 : index
      %c0_19 = arith.constant 0 : index
      %39 = vector.load %arg4[%c0_17, %c0_18, %c0_19] : memref<1x8x128xf32, #tpu.memory_space<vmem>>, vector<1x8x128xf32>
      tpu.vector_store %arg4[%c0_17, %c0_18, %c0_19], %38 {strides = array<i32>} : memref<1x8x128xf32, #tpu.memory_space<vmem>>, vector<1x8x128xf32>,
    } else {
    }
    %c128_i32_8 = arith.constant 128 : i32
    %23 = arith.addi %18, %c128_i32_8 : i32
    %c8_i32_9 = arith.constant 8 : i32
    %24 = arith.cmpi sgt, %23, %c8_i32_9 : i32
    %25 = arith.extui %24 : i1 to i32
    %c0_i32_10 = arith.constant 0 : i32
    %26 = arith.cmpi ne, %25, %c0_i32_10 : i32
    scf.if %26 {
      %27 = tpu.iota {dimensions = array<i32: 0>} : vector<1x128xi32>
      %c128_i32_11 = arith.constant 128 : i32
      %28 = vector.broadcast %c128_i32_11 : i32 to vector<1x128xi32>
      %29 = arith.muli %27, %28 : vector<1x128xi32>
      %30 = tpu.iota {dimensions = array<i32: 1>} : vector<1x128xi32>
      %31 = arith.addi %29, %30 : vector<1x128xi32>
      %32 = vector.broadcast %18 : i32 to vector<1x128xi32>
      %33 = arith.addi %32, %31 : vector<1x128xi32>
      %c8_i32_12 = arith.constant 8 : i32
      %34 = vector.broadcast %c8_i32_12 : i32 to vector<1x128xi32>
      %35 = arith.cmpi slt, %33, %34 : vector<1x128xi32>
      %cst_13 = arith.constant 0.000000e+00 : f32
      %36 = vector.broadcast %cst_13 : f32 to vector<1x128xf32>
      %37 = arith.select %35, %15, %36 : vector<1x128xi1>, vector<1x128xf32>
      %cst_14 = arith.constant dense<0.000000e+00> : vector<128xf32>
      %38 = vector.multi_reduction <add>, %37, %cst_14 [0] : vector<1x128xf32> to vector<128xf32>
      %39 = vector.shape_cast %38 : vector<128xf32> to vector<1x128xf32>
      %40 = tpu.iota {dimensions = array<i32: 0>} : vector<8x128xi32>
      %c0_i32_15 = arith.constant 0 : i32
      %41 = vector.broadcast %c0_i32_15 : i32 to vector<8x128xi32>
      %42 = arith.cmpi eq, %40, %41 : vector<8x128xi32>
      %43 = vector.shape_cast %39 : vector<1x128xf32> to vector<1x128xf32>
      %44 = vector.broadcast %43 : vector<1x128xf32> to vector<8x128xf32>
      %cst_16 = arith.constant 0.000000e+00 : f32
      %45 = vector.broadcast %cst_16 : f32 to vector<8x128xf32>
      %46 = arith.select %42, %44, %45 : vector<8x128xi1>, vector<8x128xf32>
      %c0_17 = arith.constant 0 : index
      %c0_18 = arith.constant 0 : index
      %c0_19 = arith.constant 0 : index
      %47 = vector.load %arg4[%c0_17, %c0_18, %c0_19] : memref<1x8x128xf32, #tpu.memory_space<vmem>>, vector<1x8x128xf32>
      %48 = vector.shape_cast %46 : vector<8x128xf32> to vector<1x8x128xf32>
      %49 = arith.addf %47, %48 : vector<1x8x128xf32>
      %c0_20 = arith.constant 0 : index
      %c0_21 = arith.constant 0 : index
      %c0_22 = arith.constant 0 : index
      %50 = vector.load %arg4[%c0_20, %c0_21, %c0_22] : memref<1x8x128xf32, #tpu.memory_space<vmem>>, vector<1x8x128xf32>
      tpu.vector_store %arg4[%c0_20, %c0_21, %c0_22], %49 {strides = array<i32>} : memref<1x8x128xf32, #tpu.memory_space<vmem>>, vector<1x8x128xf32>,
    } else {
    }
    return
  }
  func.func @transform_0(%arg0: i32, %arg1: i32) -> (i32, i32) {
    %c1_i32 = arith.constant 1 : i32
    %0 = arith.muli %arg0, %c1_i32 : i32
    %1 = arith.addi %0, %arg1 : i32
    %c0_i32 = arith.constant 0 : i32
    %2 = arith.minsi %1, %c0_i32 : i32
    %c0_i32_0 = arith.constant 0 : i32
    %c0_i32_1 = arith.constant 0 : i32
    return %2, %c0_i32_0 : i32, i32
  }
  func.func @transform_1(%arg0: i32, %arg1: i32) -> (i32, i32) {
    %c1_i32 = arith.constant 1 : i32
    %0 = arith.muli %arg0, %c1_i32 : i32
    %1 = arith.addi %0, %arg1 : i32
    %c0_i32 = arith.constant 0 : i32
    %2 = arith.minsi %1, %c0_i32 : i32
    %c0_i32_0 = arith.constant 0 : i32
    %c0_i32_1 = arith.constant 0 : i32
    return %2, %c0_i32_0 : i32, i32
  }
  func.func @transform_2(%arg0: i32, %arg1: i32) -> (i32, i32, i32) {
    %c0_i32 = arith.constant 0 : i32
    %c0_i32_0 = arith.constant 0 : i32
    %c0_i32_1 = arith.constant 0 : i32
    return %arg0, %c0_i32, %c0_i32_0 : i32, i32, i32
  }
}

</mosaic_0001>

<llo_original>
// kernel: tpu_custom_call.1
$region0: #{tpu_custom_call.1}
  #allocation0 [shape = 'u32[]', space=smem, size = 0x4, offset = 0x4, fixed_abs, tag = 'smem constant byte address 0x4 - core index']
  #allocation1 [shape = 'u32[144,128]{1,0:T(1,128)}', space=vmem, size = 0x12000, scoped, tag = 'internal scratch']
  %s0 = inlined_call_operand.hbm [shape: f32[1,128], index: 0, kind: input, shape index: {}]
  %s1 = inlined_call_operand.vmem [shape: f32[1,128], index: 1, kind: input, shape index: {}]
  %s2 = inlined_call_operand.hbm [shape: f32[1,8,128], index: 2, kind: output, shape index: {}]
  %s3 = sld [smem:[#allocation0]]
  $region34: #{tpu_custom_call.1} parent=0
    _
  %s5 = ssub.s32 1, %s3
  %s6 = scalar_select 0, %s5, %s3
  $region1: #{tpu_custom_call.1} parent=0
    #allocation2 [shape = 'u8[512]{0}', space=vmem, size = 0x400, scoped, tag = 'input window, operand 0, single buffered']
    #allocation3 [shape = 's32[1]{0}', space=sflag, size = 0x4, scoped, tag = 'scoped memory for tpu_custom_call.1']
    #allocation4 [shape = 's32[1]{0}', space=sflag, size = 0x4, scoped, tag = 'scoped memory for tpu_custom_call.1']
    #allocation5 [shape = 'u8[4096]{0}', space=vmem, size = 0x1000, scoped, tag = 'output window, operand 0, single buffered']
    %7 = vsyncpa [#allocation3], 0
    %8 = vsyncpa [#allocation4], 0
    // Predicated region
    $region2: #{tpu_custom_call.1} parent=1 // pred_check
      _
    $region3: #{tpu_custom_call.1} parent=1 // pred_check_branch
      %10 = sbr.rel (0) target = $region5
    $region4: #{tpu_custom_call.1} parent=1 // pred_region
      %s11 = sadd.s32 0, 0
      %p12 = scmp.lt.s32.totalorder %s11, 0
      %s13 = scalar_select %p12, %s11, 0
      %s15 = ssub.s32 16, 16
      %16 = vsyncadd [#allocation3], %s15
      %s17 = smul.addr %s13, 16
      %s18 = scalar_lea.hbm %s0, %s17
      %s20 = sshll.u32 [#allocation2], 4
      %s21 = int_to_ptr.vmem [resolvable:$true] %s20
      %23 = dma.hbm_to_vmem [thread:$0]  %s18, 16, %s21, [#allocation3]
    $region5: #{tpu_custom_call.1} parent=1 // pred_fallthru
      _
    // Predicated region
    $region6: #{tpu_custom_call.1} parent=1 // pred_check
      _
    $region7: #{tpu_custom_call.1} parent=1 // pred_check_branch
      %25 = sbr.rel (0) target = $region9
    $region8: #{tpu_custom_call.1} parent=1 // pred_region
      %s26 = sadd.s32 0, 0
      %p27 = scmp.lt.s32.totalorder %s26, 0
      %s28 = scalar_select %p27, %s26, 0
      %p29 = scmp.lt.s32.totalorder %s28, 0
      %s30 = scalar_select %p29, %s28, 0
      %s31 = scalar_lea.vmem %s1, %s30
      %s32 = sadd.s32 0, 0
      %p33 = scmp.lt.s32.totalorder %s32, 0
      %s34 = scalar_select %p33, %s32, 0
    $region9: #{tpu_custom_call.1} parent=1 // pred_fallthru
      _
    // Predicated region
    $region10: #{tpu_custom_call.1} parent=1 // pred_check
      _
    $region11: #{tpu_custom_call.1} parent=1 // pred_check_branch
      %36 = sbr.rel (0) target = $region13
    $region12: #{tpu_custom_call.1} parent=1 // pred_region
      %37 = dma.done [#allocation3], 16
    $region13: #{tpu_custom_call.1} parent=1 // pred_fallthru
      _
    %s38 = sadd.s32 0, 0
    %p39 = scmp.lt.s32.totalorder %s38, 0
    %s40 = scalar_select %p39, %s38, 0
    %p41 = scmp.lt.s32.totalorder %s40, 0
    %s42 = scalar_select %p41, %s40, 0
    %s43 = scalar_lea.vmem %s1, %s42
    %s44 = sadd.s32 0, 0
    %p45 = scmp.lt.s32.totalorder %s44, 0
    %s46 = scalar_select %p45, %s44, 0
    %s47 = sadd.s32 0, 0
    %p48 = scmp.lt.s32.totalorder %s47, 0
    %s49 = scalar_select %p48, %s47, 0
    %p50 = scmp.lt.s32.totalorder %s49, 0
    %s51 = scalar_select %p50, %s49, 0
    %s52 = scalar_lea.vmem %s1, %s51
    %s53 = sadd.s32 0, 0
    %p54 = scmp.lt.s32.totalorder %s53, 0
    %s55 = scalar_select %p54, %s53, 0
    %p56 = scmp.eq.s32.totalorder 0, 0
    // Predicated region
    $region14: #{tpu_custom_call.1} parent=1 // pred_check
      %p57 = pneg %p56
    $region15: #{tpu_custom_call.1} parent=1 // pred_check_branch
      %59 = sbr.rel (%p57) target = $region17
    $region16: #{tpu_custom_call.1} parent=1 // pred_region
      %60 = vst [vmem:[#allocation5] sm:$0xff] 0.0
    $region17: #{tpu_custom_call.1} parent=1 // pred_fallthru
      _
    %v61 = vld [vmem:[#allocation2] sm:$0x1]
    %v62 = vld [vmem:[%s52] sm:$0x1]
    %v63 = vsub.f32 %v62, %v61
    %v64 = vmax.f32 %v63, 0.0
    %v65 = vand.u32 2147483647, %v63
    %v66 = vsub.f32 0.0, %v65
    %v67 = vmul.f32 %v66, 1.442695
    %v68 = vpow.pop %v67
    %v69 = vadd.f32 %v68, 1.0
    %v70 = vlog2.pop %v69
    %v71 = vmul.f32 %v70, 0.6931472
    %v72 = vadd.f32 %v64, %v71
    %s73 = sadd.s32 0, 0
    %s74 = smul.u32 %s73, 128
    %s75 = sadd.s32 %s74, 128
    %p76 = scmp.le.s32.totalorder %s75, 8
    // Predicated region
    $region18: #{tpu_custom_call.1} parent=1 // pred_check
      %p77 = pneg %p76
    $region19: #{tpu_custom_call.1} parent=1 // pred_check_branch
      %79 = sbr.rel (%p77) target = $region21
    $region20: #{tpu_custom_call.1} parent=1 // pred_region
      %v80 = vadd.f32 %v72, 0.0
      %v81 = vlaneseq
      %v82 = vshrl.u32 %v81, 7
      %vm83 = vcmp.eq.s32.totalorder %v82, 0
      %v85 = vlaneseq
      %v86 = vshrl.u32 %v85, 7
      %v87 = vsub.s32 0, %v86
      %v88 = vrot.slane %v80, %v87
      %v90 = vsel %vm83, %v88, 0.0
      %v91 = vld [vmem:[#allocation5] sm:$0xff]
      %v92 = vadd.f32 %v91, %v90
      %93 = vst [vmem:[#allocation5] sm:$0xff] %v92
    $region21: #{tpu_custom_call.1} parent=1 // pred_fallthru
      _
    %p94 = scmp.gt.s32.totalorder %s75, 8
    // Predicated region
    $region22: #{tpu_custom_call.1} parent=1 // pred_check
      %p95 = pneg %p94
    $region23: #{tpu_custom_call.1} parent=1 // pred_check_branch
      %97 = sbr.rel (%p95) target = $region25
    $region24: #{tpu_custom_call.1} parent=1 // pred_region
      %v98 = vlaneseq
      %v99 = vshrl.u32 %v98, 7
      %v100 = vmul.u32 %v99, 128
      %v101 = vlaneseq
      %v102 = vand.u32 %v101, 127
      %v103 = vadd.s32 %v100, %v102
      %v104 = vstv %s74
      %v105 = vadd.s32 %v104, %v103
      %vm106 = vcmp.lt.s32.totalorder %v105, 8
      %v107 = vsel %vm106, %v72, 0.0
      %v108 = vadd.f32 %v107, 0.0
      %vm109 = vcmp.eq.s32.totalorder %v99, 0
      %v110 = vlaneseq
      %v111 = vshrl.u32 %v110, 7
      %v112 = vsub.s32 0, %v111
      %v113 = vrot.slane %v108, %v112
      %v114 = vsel %vm109, %v113, 0.0
      %v115 = vld [vmem:[#allocation5] sm:$0xff]
      %v116 = vadd.f32 %v115, %v114
      %117 = vst [vmem:[#allocation5] sm:$0xff] %v116
    $region25: #{tpu_custom_call.1} parent=1 // pred_fallthru
      _
    // Predicated region
    $region26: #{tpu_custom_call.1} parent=1 // pred_check
      _
    $region27: #{tpu_custom_call.1} parent=1 // pred_check_branch
      %119 = sbr.rel (0) target = $region29
    $region28: #{tpu_custom_call.1} parent=1 // pred_region
      %s121 = ssub.s32 128, 128
      %122 = vsyncadd [#allocation4], %s121
      %s124 = sshll.u32 [#allocation5], 4
      %s125 = int_to_ptr.vmem [resolvable:$true] %s124
      %127 = dma.vmem_to_hbm [thread:$0]  %s125, 128, %s2, [#allocation4]
    $region29: #{tpu_custom_call.1} parent=1 // pred_fallthru
      _
    // Predicated region
    $region30: #{tpu_custom_call.1} parent=1 // pred_check
      _
    $region31: #{tpu_custom_call.1} parent=1 // pred_check_branch
      %129 = sbr.rel (0) target = $region33
    $region32: #{tpu_custom_call.1} parent=1 // pred_region
      %130 = dma.done [#allocation4], 128
    $region33: #{tpu_custom_call.1} parent=1 // pred_fallthru
      _
    %131 = vsyncpa [#allocation3], 1
    %132 = vsyncpa [#allocation4], 1

</llo_original>
